<compile_context>
chip_gen: v7x
topology: tpu7x:2x2x1
jax: 0.10.0
libtpu: 0.0.40
codegen_flags: <defaults>
</compile_context>

<pallas_src>
import functools

import numpy as np
import jax
import jax.numpy as jnp
from jax import lax
from jax.experimental import pallas as pl
from jax.experimental.pallas import tpu as pltpu


def _sc_kernel(x_ref, w1_ref, b1_ref, w2_ref, b2_ref, w7_ref, b7_ref, m_ref,
               o_ref, *, H, W):
    # x_ref : (1, C, H*W)   current image; C on sublanes, H*W on lanes
    # w1_ref: (Cr, C)       1x1 conv #1 weight
    # b1_ref: (Cr, 1)
    # w2_ref: (C, Cr)       1x1 conv #2 weight
    # b2_ref: (C, 1)
    # w7_ref: (56, C)       7x7 conv weight, row r = 8*(dw+3) + (dh+3); rows
    #                       with (dh+3)==7 are zero padding (sublane-tile align)
    # b7_ref: (1, 1)
    # m_ref : (56, H*W)     0/1 border mask per tap row (pre-roll mask)
    # o_ref : (1, C, H*W)
    x = x_ref[0]                                            # (C, HW) f32

    # ---------------- channel attention (tiny) ----------------
    pooled = jnp.mean(x, axis=1, keepdims=True)             # (C, 1) lane reduce
    hid = jnp.maximum(
        jnp.dot(w1_ref[...], pooled, preferred_element_type=jnp.float32)
        + b1_ref[...], 0.0)                                 # (Cr, 1)
    ca = jax.nn.sigmoid(
        jnp.dot(w2_ref[...], hid, preferred_element_type=jnp.float32)
        + b2_ref[...])                                      # (C, 1)

    # ---------------- spatial attention ----------------
    # One wide MXU matmul: taps[r, p] = sum_c w7[r, c] * x[c, p]
    taps = jnp.dot(w7_ref[...], x, preferred_element_type=jnp.float32)  # (56, HW)
    # Zero entries whose shifted read would correspond to the conv's zero
    # padding (border handling of padding=3); the rolls below then need no
    # extra masking and wrap-around lanes contribute nothing.
    taps = taps * m_ref[...]

    # Stage A: shift each dw-group (8 sublane-aligned rows) by -dw along lanes
    # and accumulate the 7 groups.  Row a of `summed` then holds the partial
    # sum for dh = a - 3.
    summed = None
    for j in range(7):                                      # j = dw + 3
        dw = j - 3
        g = taps[8 * j:8 * j + 8, :]                        # (8, HW) aligned slice
        if dw != 0:
            g = jnp.roll(g, -dw, axis=1)
        summed = g if summed is None else summed + g        # (8, HW)

    # Stage B: shift row a by -(a-3)*W along lanes and accumulate -> (1, HW).
    acc = None
    for a in range(7):                                      # a = dh + 3
        dh = a - 3
        row = summed[a:a + 1, :]                            # (1, HW)
        if dh != 0:
            row = jnp.roll(row, -dh * W, axis=1)
        acc = row if acc is None else acc + row

    sa = jax.nn.sigmoid(acc + b7_ref[0, 0])                 # (1, HW)

    # ---------------- fused combine ----------------
    # x*ca + x*sa == x * (ca + sa)   (ca broadcasts over lanes, sa over sublanes)
    o_ref[0] = (x * (ca + sa)).astype(o_ref.dtype)


def _border_mask(H, W):
    """(56, H*W) 0/1 mask, row r = 8*(dw+3) + (dh+3) (pad rows zero).
    Entry [r, p] (p = (h, w)) is 1 iff the tap (dh, dw) reads position p from a
    valid output position, i.e. 0 <= h-dh < H and 0 <= w-dw < W."""
    hh, ww = np.meshgrid(np.arange(H), np.arange(W), indexing="ij")
    m = np.zeros((56, H * W), dtype=np.float32)
    for b in range(7):                # dw index
        dw = b - 3
        for a in range(7):            # dh index
            dh = a - 3
            keep = ((hh - dh >= 0) & (hh - dh < H) &
                    (ww - dw >= 0) & (ww - dw < W))
            m[8 * b + a] = keep.reshape(-1).astype(np.float32)
    return jnp.asarray(m)


def sc_module_pallas(x_nchw, params):
    """x_nchw: (B, C, H, W) float32. Returns (B, C, H, W)."""
    w1, b1, w2, b2, w7, b7 = params
    B, C, H, W = x_nchw.shape
    Cr = w1.shape[0]
    HW = H * W

    # Free contiguous reshape (no transpose, no extra HBM traffic).
    x_flat = x_nchw.reshape(B, C, HW)

    # Tiny host-side parameter reshapes.
    w1m = w1[:, :, 0, 0]                                    # (Cr, C)
    b1c = b1.reshape(Cr, 1)
    w2m = w2[:, :, 0, 0]                                    # (C, Cr)
    b2c = b2.reshape(C, 1)
    # (C, 7, 7) -> (dw, dh, C), pad dh 7->8, flatten: row r = 8*(dw+3)+(dh+3).
    w7m = jnp.transpose(w7[0], (2, 1, 0))                   # (7, 7, C)
    w7g = jnp.pad(w7m, ((0, 0), (0, 1), (0, 0))).reshape(56, C)
    b7v = b7.reshape(1, 1)
    mask = _border_mask(H, W)                               # (56, HW)

    full = lambda shape: pl.BlockSpec(shape, lambda b: (0,) * len(shape))
    kernel = functools.partial(_sc_kernel, H=H, W=W)

    out_flat = pl.pallas_call(
        kernel,
        out_shape=jax.ShapeDtypeStruct((B, C, HW), x_nchw.dtype),
        grid_spec=pltpu.PrefetchScalarGridSpec(
            num_scalar_prefetch=0,
            grid=(B,),
            in_specs=[
                pl.BlockSpec((1, C, HW), lambda b: (b, 0, 0)),
                full((Cr, C)),
                full((Cr, 1)),
                full((C, Cr)),
                full((C, 1)),
                full((56, C)),
                full((1, 1)),
                full((56, HW)),
            ],
            out_specs=pl.BlockSpec((1, C, HW), lambda b: (b, 0, 0)),
        ),
        compiler_params=pltpu.CompilerParams(
            dimension_semantics=("parallel",)),
    )(x_flat, w1m, b1c, w2m, b2c, w7g, b7v, mask)

    return out_flat.reshape(B, C, H, W)


def sc_module_reference(x, params):
    """Pure-JAX NCHW reference replicating the PyTorch forward."""
    w1, b1, w2, b2, w7, b7 = params
    dn = ("NCHW", "OIHW", "NCHW")
    pooled = jnp.mean(x, axis=(2, 3), keepdims=True)
    hid = jax.nn.relu(
        lax.conv_general_dilated(pooled, w1, (1, 1), "VALID", dimension_numbers=dn)
        + b1.reshape(1, -1, 1, 1))
    ca = jax.nn.sigmoid(
        lax.conv_general_dilated(hid, w2, (1, 1), "VALID", dimension_numbers=dn)
        + b2.reshape(1, -1, 1, 1))
    sa = jax.nn.sigmoid(
        lax.conv_general_dilated(x, w7, (1, 1), ((3, 3), (3, 3)), dimension_numbers=dn)
        + b7.reshape(1, -1, 1, 1))
    return x * ca + x * sa


if __name__ == "__main__":
    B, C, H, W = 2, 32, 16, 16
    reduction = 16
    Cr = C // reduction

    key = jax.random.PRNGKey(0)
    kx, k1, k2, k3, k4, k5, k6 = jax.random.split(key, 7)

    x = jax.random.normal(kx, (B, C, H, W), dtype=jnp.float32)

    # deterministic synthetic parameters (PyTorch conv weight shapes)
    w1 = jax.random.normal(k1, (Cr, C, 1, 1), dtype=jnp.float32) * 0.1
    b1 = jax.random.normal(k2, (Cr,), dtype=jnp.float32) * 0.1
    w2 = jax.random.normal(k3, (C, Cr, 1, 1), dtype=jnp.float32) * 0.1
    b2 = jax.random.normal(k4, (C,), dtype=jnp.float32) * 0.1
    w7 = jax.random.normal(k5, (1, C, 7, 7), dtype=jnp.float32) * 0.05
    b7 = jax.random.normal(k6, (1,), dtype=jnp.float32) * 0.1
    params = (w1, b1, w2, b2, w7, b7)

    out = jax.block_until_ready(sc_module_pallas(x, params))
    ref = jax.block_until_ready(sc_module_reference(x, params))

    assert out.shape == (B, C, H, W)
    assert jnp.allclose(out, ref, rtol=1e-4, atol=1e-4), (
        float(jnp.max(jnp.abs(out - ref))))
    print("KERNEL_OK")
</pallas_src>

<mosaic_0001>
module attributes {stable_mosaic.version = 11 : i64} {
  func.func @_sc_kernel(%arg0: i32, %arg1: memref<1x32x256xf32, #tpu.memory_space<vmem>>, %arg2: memref<2x32xf32, #tpu.memory_space<vmem>>, %arg3: memref<2x1xf32, #tpu.memory_space<vmem>>, %arg4: memref<32x2xf32, #tpu.memory_space<vmem>>, %arg5: memref<32x1xf32, #tpu.memory_space<vmem>>, %arg6: memref<56x32xf32, #tpu.memory_space<vmem>>, %arg7: memref<1x1xf32, #tpu.memory_space<vmem>>, %arg8: memref<56x256xf32, #tpu.memory_space<vmem>>, %arg9: memref<1x32x256xf32, #tpu.memory_space<vmem>>) attributes {dimension_semantics = [#tpu.dimension_semantics<parallel>], iteration_bounds = array<i64: 2>, scalar_prefetch = 0 : i64, scratch_operands = 0 : i64, tpu.core_type = #tpu.core_type<tc>, window_params = [{transform_indices = @transform_0, window_bounds = array<i64: 1, 32, 256>}, {pipeline_mode = #tpu.pipeline_mode<synchronous>, transform_indices = @transform_1, window_bounds = array<i64: 2, 32>}, {pipeline_mode = #tpu.pipeline_mode<synchronous>, transform_indices = @transform_2, window_bounds = array<i64: 2, 1>}, {pipeline_mode = #tpu.pipeline_mode<synchronous>, transform_indices = @transform_3, window_bounds = array<i64: 32, 2>}, {pipeline_mode = #tpu.pipeline_mode<synchronous>, transform_indices = @transform_4, window_bounds = array<i64: 32, 1>}, {pipeline_mode = #tpu.pipeline_mode<synchronous>, transform_indices = @transform_5, window_bounds = array<i64: 56, 32>}, {pipeline_mode = #tpu.pipeline_mode<synchronous>, transform_indices = @transform_6, window_bounds = array<i64: 1, 1>}, {pipeline_mode = #tpu.pipeline_mode<synchronous>, transform_indices = @transform_7, window_bounds = array<i64: 56, 256>}, {transform_indices = @transform_8, window_bounds = array<i64: 1, 32, 256>}]} {
    %c0 = arith.constant 0 : index
    %c0_0 = arith.constant 0 : index
    %c0_1 = arith.constant 0 : index
    %0 = vector.load %arg1[%c0, %c0_0, %c0_1] : memref<1x32x256xf32, #tpu.memory_space<vmem>>, vector<1x32x256xf32>
    %1 = vector.shape_cast %0 : vector<1x32x256xf32> to vector<32x256xf32>
    %cst = arith.constant dense<0.000000e+00> : vector<32xf32>
    %2 = vector.multi_reduction <add>, %1, %cst [1] : vector<32x256xf32> to vector<32xf32>
    %3 = vector.shape_cast %2 : vector<32xf32> to vector<32x1xf32>
    %cst_2 = arith.constant 2.560000e+02 : f32
    %4 = vector.broadcast %cst_2 : f32 to vector<32x1xf32>
    %5 = arith.divf %3, %4 : vector<32x1xf32>
    %c0_3 = arith.constant 0 : index
    %c0_4 = arith.constant 0 : index
    %6 = vector.load %arg2[%c0_3, %c0_4] : memref<2x32xf32, #tpu.memory_space<vmem>>, vector<2x32xf32>
    %cst_5 = arith.constant dense<0.000000e+00> : vector<2x1xf32>
    %7 = tpu.matmul %6, %5, %cst_5 {dimension_numbers = #tpu.dot_dimension_numbers<[1], [0], [0], [1], [0, 0, 1, 1], [], []>} : vector<2x32xf32>, vector<32x1xf32>, vector<2x1xf32> -> vector<2x1xf32>
    %c0_6 = arith.constant 0 : index
    %c0_7 = arith.constant 0 : index
    %8 = vector.load %arg3[%c0_6, %c0_7] : memref<2x1xf32, #tpu.memory_space<vmem>>, vector<2x1xf32>
    %9 = arith.addf %7, %8 : vector<2x1xf32>
    %cst_8 = arith.constant 0.000000e+00 : f32
    %10 = vector.broadcast %cst_8 : f32 to vector<2x1xf32>
    %11 = arith.maximumf %9, %10 : vector<2x1xf32>
    %c0_9 = arith.constant 0 : index
    %c0_10 = arith.constant 0 : index
    %12 = vector.load %arg4[%c0_9, %c0_10] : memref<32x2xf32, #tpu.memory_space<vmem>>, vector<32x2xf32>
    %cst_11 = arith.constant dense<0.000000e+00> : vector<32x1xf32>
    %13 = tpu.matmul %12, %11, %cst_11 {dimension_numbers = #tpu.dot_dimension_numbers<[1], [0], [0], [1], [0, 0, 1, 1], [], []>} : vector<32x2xf32>, vector<2x1xf32>, vector<32x1xf32> -> vector<32x1xf32>
    %c0_12 = arith.constant 0 : index
    %c0_13 = arith.constant 0 : index
    %14 = vector.load %arg5[%c0_12, %c0_13] : memref<32x1xf32, #tpu.memory_space<vmem>>, vector<32x1xf32>
    %15 = arith.addf %13, %14 : vector<32x1xf32>
    %16 = arith.negf %15 : vector<32x1xf32>
    %17 = math.exp %16 : vector<32x1xf32>
    %cst_14 = arith.constant 1.000000e+00 : f32
    %18 = vector.broadcast %cst_14 : f32 to vector<32x1xf32>
    %19 = arith.addf %18, %17 : vector<32x1xf32>
    %20 = arith.divf %18, %19 : vector<32x1xf32>
    %c0_15 = arith.constant 0 : index
    %c0_16 = arith.constant 0 : index
    %21 = vector.load %arg6[%c0_15, %c0_16] : memref<56x32xf32, #tpu.memory_space<vmem>>, vector<56x32xf32>
    %cst_17 = arith.constant dense<0.000000e+00> : vector<56x256xf32>
    %22 = tpu.matmul %21, %1, %cst_17 {dimension_numbers = #tpu.dot_dimension_numbers<[1], [0], [0], [1], [0, 0, 1, 1], [], []>} : vector<56x32xf32>, vector<32x256xf32>, vector<56x256xf32> -> vector<56x256xf32>
    %c0_18 = arith.constant 0 : index
    %c0_19 = arith.constant 0 : index
    %23 = vector.load %arg8[%c0_18, %c0_19] : memref<56x256xf32, #tpu.memory_space<vmem>>, vector<56x256xf32>
    %24 = arith.mulf %22, %23 : vector<56x256xf32>
    %25 = vector.extract_strided_slice %24 {offsets = [0, 0], sizes = [8, 256], strides = [1, 1]} : vector<56x256xf32> to vector<8x256xf32>
    %26 = vector.extract_strided_slice %25 {offsets = [0, 253], sizes = [8, 3], strides = [1, 1]} : vector<8x256xf32> to vector<8x3xf32>
    %27 = vector.extract_strided_slice %25 {offsets = [0, 0], sizes = [8, 253], strides = [1, 1]} : vector<8x256xf32> to vector<8x253xf32>
    %28 = tpu.concatenate %26, %27 in 1 : vector<8x3xf32>, vector<8x253xf32> -> vector<8x256xf32>
    %29 = vector.extract_strided_slice %24 {offsets = [8, 0], sizes = [8, 256], strides = [1, 1]} : vector<56x256xf32> to vector<8x256xf32>
    %30 = vector.extract_strided_slice %29 {offsets = [0, 254], sizes = [8, 2], strides = [1, 1]} : vector<8x256xf32> to vector<8x2xf32>
    %31 = vector.extract_strided_slice %29 {offsets = [0, 0], sizes = [8, 254], strides = [1, 1]} : vector<8x256xf32> to vector<8x254xf32>
    %32 = tpu.concatenate %30, %31 in 1 : vector<8x2xf32>, vector<8x254xf32> -> vector<8x256xf32>
    %33 = arith.addf %28, %32 : vector<8x256xf32>
    %34 = vector.extract_strided_slice %24 {offsets = [16, 0], sizes = [8, 256], strides = [1, 1]} : vector<56x256xf32> to vector<8x256xf32>
    %35 = vector.extract_strided_slice %34 {offsets = [0, 255], sizes = [8, 1], strides = [1, 1]} : vector<8x256xf32> to vector<8x1xf32>
    %36 = vector.extract_strided_slice %34 {offsets = [0, 0], sizes = [8, 255], strides = [1, 1]} : vector<8x256xf32> to vector<8x255xf32>
    %37 = tpu.concatenate %35, %36 in 1 : vector<8x1xf32>, vector<8x255xf32> -> vector<8x256xf32>
    %38 = arith.addf %33, %37 : vector<8x256xf32>
    %39 = vector.extract_strided_slice %24 {offsets = [24, 0], sizes = [8, 256], strides = [1, 1]} : vector<56x256xf32> to vector<8x256xf32>
    %40 = arith.addf %38, %39 : vector<8x256xf32>
    %41 = vector.extract_strided_slice %24 {offsets = [32, 0], sizes = [8, 256], strides = [1, 1]} : vector<56x256xf32> to vector<8x256xf32>
    %42 = vector.extract_strided_slice %41 {offsets = [0, 1], sizes = [8, 255], strides = [1, 1]} : vector<8x256xf32> to vector<8x255xf32>
    %43 = vector.extract_strided_slice %41 {offsets = [0, 0], sizes = [8, 1], strides = [1, 1]} : vector<8x256xf32> to vector<8x1xf32>
    %44 = tpu.concatenate %42, %43 in 1 : vector<8x255xf32>, vector<8x1xf32> -> vector<8x256xf32>
    %45 = arith.addf %40, %44 : vector<8x256xf32>
    %46 = vector.extract_strided_slice %24 {offsets = [40, 0], sizes = [8, 256], strides = [1, 1]} : vector<56x256xf32> to vector<8x256xf32>
    %47 = vector.extract_strided_slice %46 {offsets = [0, 2], sizes = [8, 254], strides = [1, 1]} : vector<8x256xf32> to vector<8x254xf32>
    %48 = vector.extract_strided_slice %46 {offsets = [0, 0], sizes = [8, 2], strides = [1, 1]} : vector<8x256xf32> to vector<8x2xf32>
    %49 = tpu.concatenate %47, %48 in 1 : vector<8x254xf32>, vector<8x2xf32> -> vector<8x256xf32>
    %50 = arith.addf %45, %49 : vector<8x256xf32>
    %51 = vector.extract_strided_slice %24 {offsets = [48, 0], sizes = [8, 256], strides = [1, 1]} : vector<56x256xf32> to vector<8x256xf32>
    %52 = vector.extract_strided_slice %51 {offsets = [0, 3], sizes = [8, 253], strides = [1, 1]} : vector<8x256xf32> to vector<8x253xf32>
    %53 = vector.extract_strided_slice %51 {offsets = [0, 0], sizes = [8, 3], strides = [1, 1]} : vector<8x256xf32> to vector<8x3xf32>
    %54 = tpu.concatenate %52, %53 in 1 : vector<8x253xf32>, vector<8x3xf32> -> vector<8x256xf32>
    %55 = arith.addf %50, %54 : vector<8x256xf32>
    %56 = vector.extract_strided_slice %55 {offsets = [0, 0], sizes = [1, 256], strides = [1, 1]} : vector<8x256xf32> to vector<1x256xf32>
    %57 = vector.extract_strided_slice %56 {offsets = [0, 208], sizes = [1, 48], strides = [1, 1]} : vector<1x256xf32> to vector<1x48xf32>
    %58 = vector.extract_strided_slice %56 {offsets = [0, 0], sizes = [1, 208], strides = [1, 1]} : vector<1x256xf32> to vector<1x208xf32>
    %59 = tpu.concatenate %57, %58 in 1 : vector<1x48xf32>, vector<1x208xf32> -> vector<1x256xf32>
    %60 = vector.extract_strided_slice %55 {offsets = [1, 0], sizes = [1, 256], strides = [1, 1]} : vector<8x256xf32> to vector<1x256xf32>
    %61 = vector.extract_strided_slice %60 {offsets = [0, 224], sizes = [1, 32], strides = [1, 1]} : vector<1x256xf32> to vector<1x32xf32>
    %62 = vector.extract_strided_slice %60 {offsets = [0, 0], sizes = [1, 224], strides = [1, 1]} : vector<1x256xf32> to vector<1x224xf32>
    %63 = tpu.concatenate %61, %62 in 1 : vector<1x32xf32>, vector<1x224xf32> -> vector<1x256xf32>
    %64 = arith.addf %59, %63 : vector<1x256xf32>
    %65 = vector.extract_strided_slice %55 {offsets = [2, 0], sizes = [1, 256], strides = [1, 1]} : vector<8x256xf32> to vector<1x256xf32>
    %66 = vector.extract_strided_slice %65 {offsets = [0, 240], sizes = [1, 16], strides = [1, 1]} : vector<1x256xf32> to vector<1x16xf32>
    %67 = vector.extract_strided_slice %65 {offsets = [0, 0], sizes = [1, 240], strides = [1, 1]} : vector<1x256xf32> to vector<1x240xf32>
    %68 = tpu.concatenate %66, %67 in 1 : vector<1x16xf32>, vector<1x240xf32> -> vector<1x256xf32>
    %69 = arith.addf %64, %68 : vector<1x256xf32>
    %70 = vector.extract_strided_slice %55 {offsets = [3, 0], sizes = [1, 256], strides = [1, 1]} : vector<8x256xf32> to vector<1x256xf32>
    %71 = arith.addf %69, %70 : vector<1x256xf32>
    %72 = vector.extract_strided_slice %55 {offsets = [4, 0], sizes = [1, 256], strides = [1, 1]} : vector<8x256xf32> to vector<1x256xf32>
    %73 = vector.extract_strided_slice %72 {offsets = [0, 16], sizes = [1, 240], strides = [1, 1]} : vector<1x256xf32> to vector<1x240xf32>
    %74 = vector.extract_strided_slice %72 {offsets = [0, 0], sizes = [1, 16], strides = [1, 1]} : vector<1x256xf32> to vector<1x16xf32>
    %75 = tpu.concatenate %73, %74 in 1 : vector<1x240xf32>, vector<1x16xf32> -> vector<1x256xf32>
    %76 = arith.addf %71, %75 : vector<1x256xf32>
    %77 = vector.extract_strided_slice %55 {offsets = [5, 0], sizes = [1, 256], strides = [1, 1]} : vector<8x256xf32> to vector<1x256xf32>
    %78 = vector.extract_strided_slice %77 {offsets = [0, 32], sizes = [1, 224], strides = [1, 1]} : vector<1x256xf32> to vector<1x224xf32>
    %79 = vector.extract_strided_slice %77 {offsets = [0, 0], sizes = [1, 32], strides = [1, 1]} : vector<1x256xf32> to vector<1x32xf32>
    %80 = tpu.concatenate %78, %79 in 1 : vector<1x224xf32>, vector<1x32xf32> -> vector<1x256xf32>
    %81 = arith.addf %76, %80 : vector<1x256xf32>
    %82 = vector.extract_strided_slice %55 {offsets = [6, 0], sizes = [1, 256], strides = [1, 1]} : vector<8x256xf32> to vector<1x256xf32>
    %83 = vector.extract_strided_slice %82 {offsets = [0, 48], sizes = [1, 208], strides = [1, 1]} : vector<1x256xf32> to vector<1x208xf32>
    %84 = vector.extract_strided_slice %82 {offsets = [0, 0], sizes = [1, 48], strides = [1, 1]} : vector<1x256xf32> to vector<1x48xf32>
    %85 = tpu.concatenate %83, %84 in 1 : vector<1x208xf32>, vector<1x48xf32> -> vector<1x256xf32>
    %86 = arith.addf %81, %85 : vector<1x256xf32>
    %c0_20 = arith.constant 0 : index
    %c0_21 = arith.constant 0 : index
    %87 = vector.load %arg7[%c0_20, %c0_21] : memref<1x1xf32, #tpu.memory_space<vmem>>, vector<1x1xf32>
    %88 = vector.extract %87[0, 0] : f32 from vector<1x1xf32>
    %89 = vector.broadcast %88 : f32 to vector<1x256xf32>
    %90 = arith.addf %86, %89 : vector<1x256xf32>
    %91 = arith.negf %90 : vector<1x256xf32>
    %92 = math.exp %91 : vector<1x256xf32>
    %cst_22 = arith.constant 1.000000e+00 : f32
    %93 = vector.broadcast %cst_22 : f32 to vector<1x256xf32>
    %94 = arith.addf %93, %92 : vector<1x256xf32>
    %95 = arith.divf %93, %94 : vector<1x256xf32>
    %96 = vector.broadcast %20 : vector<32x1xf32> to vector<32x256xf32>
    %97 = vector.broadcast %95 : vector<1x256xf32> to vector<32x256xf32>
    %98 = arith.addf %96, %97 : vector<32x256xf32>
    %99 = arith.mulf %1, %98 : vector<32x256xf32>
    %c0_23 = arith.constant 0 : index
    %c0_24 = arith.constant 0 : index
    %c0_25 = arith.constant 0 : index
    %100 = vector.load %arg9[%c0_23, %c0_24, %c0_25] : memref<1x32x256xf32, #tpu.memory_space<vmem>>, vector<1x32x256xf32>
    %101 = vector.shape_cast %100 : vector<1x32x256xf32> to vector<32x256xf32>
    %102 = vector.shape_cast %99 : vector<32x256xf32> to vector<1x32x256xf32>
    tpu.vector_store %arg9[%c0_23, %c0_24, %c0_25], %102 {strides = array<i32>} : memref<1x32x256xf32, #tpu.memory_space<vmem>>, vector<1x32x256xf32>,
    return
  }
  func.func @transform_0(%arg0: i32) -> (i32, i32, i32) {
    %c0_i32 = arith.constant 0 : i32
    %c0_i32_0 = arith.constant 0 : i32
    %c0_i32_1 = arith.constant 0 : i32
    return %arg0, %c0_i32, %c0_i32_0 : i32, i32, i32
  }
  func.func @transform_1(%arg0: i32) -> (i32, i32) {
    %c0_i32 = arith.constant 0 : i32
    %c0_i32_0 = arith.constant 0 : i32
    %c0_i32_1 = arith.constant 0 : i32
    return %c0_i32, %c0_i32_0 : i32, i32
  }
  func.func @transform_2(%arg0: i32) -> (i32, i32) {
    %c0_i32 = arith.constant 0 : i32
    %c0_i32_0 = arith.constant 0 : i32
    %c0_i32_1 = arith.constant 0 : i32
    return %c0_i32, %c0_i32_0 : i32, i32
  }
  func.func @transform_3(%arg0: i32) -> (i32, i32) {
    %c0_i32 = arith.constant 0 : i32
    %c0_i32_0 = arith.constant 0 : i32
    %c0_i32_1 = arith.constant 0 : i32
    return %c0_i32, %c0_i32_0 : i32, i32
  }
  func.func @transform_4(%arg0: i32) -> (i32, i32) {
    %c0_i32 = arith.constant 0 : i32
    %c0_i32_0 = arith.constant 0 : i32
    %c0_i32_1 = arith.constant 0 : i32
    return %c0_i32, %c0_i32_0 : i32, i32
  }
  func.func @transform_5(%arg0: i32) -> (i32, i32) {
    %c0_i32 = arith.constant 0 : i32
    %c0_i32_0 = arith.constant 0 : i32
    %c0_i32_1 = arith.constant 0 : i32
    return %c0_i32, %c0_i32_0 : i32, i32
  }
  func.func @transform_6(%arg0: i32) -> (i32, i32) {
    %c0_i32 = arith.constant 0 : i32
    %c0_i32_0 = arith.constant 0 : i32
    %c0_i32_1 = arith.constant 0 : i32
    return %c0_i32, %c0_i32_0 : i32, i32
  }
  func.func @transform_7(%arg0: i32) -> (i32, i32) {
    %c0_i32 = arith.constant 0 : i32
    %c0_i32_0 = arith.constant 0 : i32
    %c0_i32_1 = arith.constant 0 : i32
    return %c0_i32, %c0_i32_0 : i32, i32
  }
  func.func @transform_8(%arg0: i32) -> (i32, i32, i32) {
    %c0_i32 = arith.constant 0 : i32
    %c0_i32_0 = arith.constant 0 : i32
    %c0_i32_1 = arith.constant 0 : i32
    return %arg0, %c0_i32, %c0_i32_0 : i32, i32, i32
  }
}

</mosaic_0001>

<llo_original>
// kernel: tpu_custom_call.1
$region0: #{tpu_custom_call.1}
  #allocation0 [shape = 'u32[]', space=smem, size = 0x4, offset = 0x4, fixed_abs, tag = 'smem constant byte address 0x4 - core index']
  #allocation1 [shape = 'u32[144,128]{1,0:T(1,128)}', space=vmem, size = 0x12000, scoped, tag = 'internal scratch']
  #allocation2 [shape = 'f32[1,1]{1,0:T(1,128)S(1)}', space=vmem, size = 0x200, scoped, tag = 'scoped memory for tpu_custom_call.1']
  %s0 = inlined_call_operand.vmem [shape: f32[2,32,256], index: 0, kind: input, shape index: {}]
  %s1 = inlined_call_operand.vmem [shape: f32[2,32], index: 1, kind: input, shape index: {}]
  %s2 = inlined_call_operand.vmem [shape: f32[2,1], index: 2, kind: input, shape index: {}]
  %s3 = inlined_call_operand.vmem [shape: f32[32,2], index: 3, kind: input, shape index: {}]
  %s4 = inlined_call_operand.vmem [shape: f32[32,1], index: 4, kind: input, shape index: {}]
  %s5 = inlined_call_operand.vmem [shape: f32[56,32], index: 5, kind: input, shape index: {}]
  %s6 = inlined_call_operand.<no memory space> [shape: f32[1,1], index: 6, kind: input, shape index: {}]
  %s7 = inlined_call_operand.hbm [shape: f32[56,256], index: 7, kind: input, shape index: {}]
  %s8 = inlined_call_operand.hbm [shape: f32[2,32,256], index: 8, kind: output, shape index: {}]
  %s9 = sld [smem:[#allocation0]]
  $region69: #{tpu_custom_call.1} parent=0
    _
  %s11 = ssub.s32 1, %s9
  %s12 = scalar_select 0, %s11, %s9
  %v13 = vstv %s6
  %14 = vst [vmem:[#allocation2] sm:$0x1] %v13
  $region1: #{tpu_custom_call.1} parent=0
    #allocation3 [shape = 'u8[57344]{0}', space=vmem, size = 0xe000, scoped, tag = 'input window, operand 7, single buffered']
    #allocation4 [shape = 's32[2]{0}', space=sflag, size = 0x8, scoped, tag = 'scoped memory for tpu_custom_call.1']
    #allocation5 [shape = 's32[2]{0}', space=sflag, size = 0x8, scoped, tag = 'scoped memory for tpu_custom_call.1']
    #allocation6 [shape = 'u8[65536]{0}', space=vmem, size = 0x10000, scoped, tag = 'output window, operand 0']
    %15 = vsyncpa [#allocation4], 0
    %16 = vsyncpa [#allocation5], 0
    %s17 = scalar_lea.sflag [#allocation5], 1
    %18 = vsyncpa %s17, 0
    loop: start=0, step=1, limit=4
    $region2: #{tpu_custom_call.1} parent=1 // loop_pre_header
      _
    $region3: #{tpu_custom_call.1} parent=1 // loop_header
      %s20 = sphi 0, %s24
      %p21 = scmp.ge.s32.totalorder %s20, 4
      %s30 = sphi 0, %s32
      %s33 = sphi 0, %s30
      %s34 = sphi 0, %s33
      %s50 = sphi 0, %s34
      %s54 = sphi 0, %s54
      %s56 = sphi 0, %s54
      %s57 = sphi 0, %s56
      %s71 = sphi 0, %s57
      %s75 = sphi 0, %s75
      %s77 = sphi 0, %s75
      %s78 = sphi 0, %s77
      %s92 = sphi 0, %s78
      %s96 = sphi 0, %s96
      %s98 = sphi 0, %s96
      %s99 = sphi 0, %s98
      %s113 = sphi 0, %s99
      %s117 = sphi 0, %s117
      %s119 = sphi 0, %s117
      %s120 = sphi 0, %s119
      %s134 = sphi 0, %s120
      %s138 = sphi 0, %s138
      %s140 = sphi 0, %s138
      %s141 = sphi 0, %s140
      %s155 = sphi 0, %s141
      %s159 = sphi 0, %s159
      %s161 = sphi 0, %s159
      %s162 = sphi 0, %s161
      %s176 = sphi 0, %s162
      %s180 = sphi 0, %s180
      %s182 = sphi 0, %s180
      %s183 = sphi 0, %s182
      %s197 = sphi 0, %s183
      %s203 = sphi 0, %s205
      %s206 = sphi 0, %s203
      %s207 = sphi 0, %s206
      %s223 = sphi 0, %s207
    $region4: #{tpu_custom_call.1} parent=1 // loop_header_branch
      %23 = sbr.rel (%p21) target = $region8
    $region5: #{tpu_custom_call.1} parent=1 // loop_body
      %s25 = ssub.s32 %s20, 1
      %s26 = ssub.s32 %s20, 2
      %s27 = sadd.s32 %s20, 1
      %s28 = ssub.s32 %s20, %s27
      %p29 = scmp.eq.s32.totalorder %s28, 0
      %s31 = sadd.s32 %s30, 1
      %s32 = scalar_select %p29, %s30, %s31
      %p35 = pneg %p29
      %p36 = scmp.eq.s32.totalorder %s20, 1
      %p37 = por %p35, %p36
      %p38 = scmp.ne.s32.totalorder %s30, %s33
      %p39 = scmp.eq.s32.totalorder %s20, 0
      %p40 = por %p38, %p39
      %p41 = scmp.ne.s32.totalorder %s30, %s33
      %p42 = scmp.eq.s32.totalorder %s25, 1
      %p43 = por %p41, %p42
      %p44 = scmp.ne.s32.totalorder %s33, %s34
      %p45 = scmp.eq.s32.totalorder %s25, 0
      %p46 = por %p44, %p45
      %p47 = scmp.ne.s32.totalorder %s33, %s34
      %p48 = scmp.eq.s32.totalorder %s26, 1
      %p49 = por %p47, %p48
      %p51 = scmp.ne.s32.totalorder %s34, %s50
      %p52 = scmp.eq.s32.totalorder %s26, 0
      %p53 = por %p51, %p52
      %s55 = sadd.s32 %s54, 1
      %p58 = scmp.eq.s32.totalorder %s20, 1
      %p59 = scmp.ne.s32.totalorder %s54, %s56
      %p60 = scmp.eq.s32.totalorder %s20, 0
      %p61 = por %p59, %p60
      %p62 = scmp.ne.s32.totalorder %s54, %s56
      %p63 = scmp.eq.s32.totalorder %s25, 1
      %p64 = por %p62, %p63
      %p65 = scmp.ne.s32.totalorder %s56, %s57
      %p66 = scmp.eq.s32.totalorder %s25, 0
      %p67 = por %p65, %p66
      %p68 = scmp.ne.s32.totalorder %s56, %s57
      %p69 = scmp.eq.s32.totalorder %s26, 1
      %p70 = por %p68, %p69
      %p72 = scmp.ne.s32.totalorder %s57, %s71
      %p73 = scmp.eq.s32.totalorder %s26, 0
      %p74 = por %p72, %p73
      %s76 = sadd.s32 %s75, 1
      %p79 = scmp.eq.s32.totalorder %s20, 1
      %p80 = scmp.ne.s32.totalorder %s75, %s77
      %p81 = scmp.eq.s32.totalorder %s20, 0
      %p82 = por %p80, %p81
      %p83 = scmp.ne.s32.totalorder %s75, %s77
      %p84 = scmp.eq.s32.totalorder %s25, 1
      %p85 = por %p83, %p84
      %p86 = scmp.ne.s32.totalorder %s77, %s78
      %p87 = scmp.eq.s32.totalorder %s25, 0
      %p88 = por %p86, %p87
      %p89 = scmp.ne.s32.totalorder %s77, %s78
      %p90 = scmp.eq.s32.totalorder %s26, 1
      %p91 = por %p89, %p90
      %p93 = scmp.ne.s32.totalorder %s78, %s92
      %p94 = scmp.eq.s32.totalorder %s26, 0
      %p95 = por %p93, %p94
      %s97 = sadd.s32 %s96, 1
      %p100 = scmp.eq.s32.totalorder %s20, 1
      %p101 = scmp.ne.s32.totalorder %s96, %s98
      %p102 = scmp.eq.s32.totalorder %s20, 0
      %p103 = por %p101, %p102
      %p104 = scmp.ne.s32.totalorder %s96, %s98
      %p105 = scmp.eq.s32.totalorder %s25, 1
      %p106 = por %p104, %p105
      %p107 = scmp.ne.s32.totalorder %s98, %s99
      %p108 = scmp.eq.s32.totalorder %s25, 0
      %p109 = por %p107, %p108
      %p110 = scmp.ne.s32.totalorder %s98, %s99
      %p111 = scmp.eq.s32.totalorder %s26, 1
      %p112 = por %p110, %p111
      %p114 = scmp.ne.s32.totalorder %s99, %s113
      %p115 = scmp.eq.s32.totalorder %s26, 0
      %p116 = por %p114, %p115
      %s118 = sadd.s32 %s117, 1
      %p121 = scmp.eq.s32.totalorder %s20, 1
      %p122 = scmp.ne.s32.totalorder %s117, %s119
      %p123 = scmp.eq.s32.totalorder %s20, 0
      %p124 = por %p122, %p123
      %p125 = scmp.ne.s32.totalorder %s117, %s119
      %p126 = scmp.eq.s32.totalorder %s25, 1
      %p127 = por %p125, %p126
      %p128 = scmp.ne.s32.totalorder %s119, %s120
      %p129 = scmp.eq.s32.totalorder %s25, 0
      %p130 = por %p128, %p129
      %p131 = scmp.ne.s32.totalorder %s119, %s120
      %p132 = scmp.eq.s32.totalorder %s26, 1
      %p133 = por %p131, %p132
      %p135 = scmp.ne.s32.totalorder %s120, %s134
      %p136 = scmp.eq.s32.totalorder %s26, 0
      %p137 = por %p135, %p136
      %s139 = sadd.s32 %s138, 1
      %p142 = scmp.eq.s32.totalorder %s20, 1
      %p143 = scmp.ne.s32.totalorder %s138, %s140
      %p144 = scmp.eq.s32.totalorder %s20, 0
      %p145 = por %p143, %p144
      %p146 = scmp.ne.s32.totalorder %s138, %s140
      %p147 = scmp.eq.s32.totalorder %s25, 1
      %p148 = por %p146, %p147
      %p149 = scmp.ne.s32.totalorder %s140, %s141
      %p150 = scmp.eq.s32.totalorder %s25, 0
      %p151 = por %p149, %p150
      %p152 = scmp.ne.s32.totalorder %s140, %s141
      %p153 = scmp.eq.s32.totalorder %s26, 1
      %p154 = por %p152, %p153
      %p156 = scmp.ne.s32.totalorder %s141, %s155
      %p157 = scmp.eq.s32.totalorder %s26, 0
      %p158 = por %p156, %p157
      %s160 = sadd.s32 %s159, 1
      %p163 = scmp.eq.s32.totalorder %s20, 1
      %p164 = scmp.ne.s32.totalorder %s159, %s161
      %p165 = scmp.eq.s32.totalorder %s20, 0
      %p166 = por %p164, %p165
      %p167 = scmp.ne.s32.totalorder %s159, %s161
      %p168 = scmp.eq.s32.totalorder %s25, 1
      %p169 = por %p167, %p168
      %p170 = scmp.ne.s32.totalorder %s161, %s162
      %p171 = scmp.eq.s32.totalorder %s25, 0
      %p172 = por %p170, %p171
      %p173 = scmp.ne.s32.totalorder %s161, %s162
      %p174 = scmp.eq.s32.totalorder %s26, 1
      %p175 = por %p173, %p174
      %p177 = scmp.ne.s32.totalorder %s162, %s176
      %p178 = scmp.eq.s32.totalorder %s26, 0
      %p179 = por %p177, %p178
      %s181 = sadd.s32 %s180, 1
      %p184 = scmp.eq.s32.totalorder %s20, 1
      %p185 = scmp.ne.s32.totalorder %s180, %s182
      %p186 = scmp.eq.s32.totalorder %s20, 0
      %p187 = por %p185, %p186
      %p188 = scmp.ne.s32.totalorder %s180, %s182
      %p189 = scmp.eq.s32.totalorder %s25, 1
      %p190 = por %p188, %p189
      %p191 = scmp.ne.s32.totalorder %s182, %s183
      %p192 = scmp.eq.s32.totalorder %s25, 0
      %p193 = por %p191, %p192
      %p194 = scmp.ne.s32.totalorder %s182, %s183
      %p195 = scmp.eq.s32.totalorder %s26, 1
      %p196 = por %p194, %p195
      %p198 = scmp.ne.s32.totalorder %s183, %s197
      %p199 = scmp.eq.s32.totalorder %s26, 0
      %p200 = por %p198, %p199
      %s201 = ssub.s32 %s20, %s27
      %p202 = scmp.eq.s32.totalorder %s201, 0
      %s204 = sadd.s32 %s203, 1
      %s205 = scalar_select %p202, %s203, %s204
      %p208 = pneg %p202
      %p209 = scmp.eq.s32.totalorder %s20, 1
      %p210 = por %p208, %p209
      %p211 = scmp.ne.s32.totalorder %s203, %s206
      %p212 = scmp.eq.s32.totalorder %s20, 0
      %p213 = por %p211, %p212
      %p214 = scmp.ne.s32.totalorder %s203, %s206
      %p215 = scmp.eq.s32.totalorder %s25, 1
      %p216 = por %p214, %p215
      %p217 = scmp.ne.s32.totalorder %s206, %s207
      %p218 = scmp.eq.s32.totalorder %s25, 0
      %p219 = por %p217, %p218
      %p220 = scmp.ne.s32.totalorder %s206, %s207
      %p221 = scmp.eq.s32.totalorder %s26, 1
      %p222 = por %p220, %p221
      %p224 = scmp.ne.s32.totalorder %s207, %s223
      %p225 = scmp.eq.s32.totalorder %s26, 0
      %p226 = por %p224, %p225
      %p227 = scmp.le.s32.totalorder 1, %s20
      %p228 = scmp.lt.s32.totalorder %s20, 3
      %p229 = pnand %p227, %p228
      %p230 = pneg %p229
      // Predicated region
      $region9: #{tpu_custom_call.1} parent=5 // pred_check
        _
      $region10: #{tpu_custom_call.1} parent=5 // pred_check_branch
        %232 = sbr.rel (%p229) target = $region12
      $region11: #{tpu_custom_call.1} parent=5 // pred_region
        %s233 = ssub.s32 %s20, 1
        // Predicated region
        $region13: #{tpu_custom_call.1} parent=11 // pred_check
          %p234 = pneg %p67
        $region14: #{tpu_custom_call.1} parent=11 // pred_check_branch
          %236 = sbr.rel (%p234) target = $region16
        $region15: #{tpu_custom_call.1} parent=11 // pred_region
          _
        $region16: #{tpu_custom_call.1} parent=11 // pred_fallthru
          _
        // Predicated region
        $region17: #{tpu_custom_call.1} parent=11 // pred_check
          %p237 = pneg %p88
        $region18: #{tpu_custom_call.1} parent=11 // pred_check_branch
          %239 = sbr.rel (%p237) target = $region20
        $region19: #{tpu_custom_call.1} parent=11 // pred_region
          _
        $region20: #{tpu_custom_call.1} parent=11 // pred_fallthru
          _
        // Predicated region
        $region21: #{tpu_custom_call.1} parent=11 // pred_check
          %p240 = pneg %p109
        $region22: #{tpu_custom_call.1} parent=11 // pred_check_branch
          %242 = sbr.rel (%p240) target = $region24
        $region23: #{tpu_custom_call.1} parent=11 // pred_region
          _
        $region24: #{tpu_custom_call.1} parent=11 // pred_fallthru
          _
        // Predicated region
        $region25: #{tpu_custom_call.1} parent=11 // pred_check
          %p243 = pneg %p130
        $region26: #{tpu_custom_call.1} parent=11 // pred_check_branch
          %245 = sbr.rel (%p243) target = $region28
        $region27: #{tpu_custom_call.1} parent=11 // pred_region
          _
        $region28: #{tpu_custom_call.1} parent=11 // pred_fallthru
          _
        // Predicated region
        $region29: #{tpu_custom_call.1} parent=11 // pred_check
          %p246 = pneg %p151
        $region30: #{tpu_custom_call.1} parent=11 // pred_check_branch
          %248 = sbr.rel (%p246) target = $region32
        $region31: #{tpu_custom_call.1} parent=11 // pred_region
          _
        $region32: #{tpu_custom_call.1} parent=11 // pred_fallthru
          _
        // Predicated region
        $region33: #{tpu_custom_call.1} parent=11 // pred_check
          %p249 = pneg %p172
        $region34: #{tpu_custom_call.1} parent=11 // pred_check_branch
          %251 = sbr.rel (%p249) target = $region36
        $region35: #{tpu_custom_call.1} parent=11 // pred_region
          _
        $region36: #{tpu_custom_call.1} parent=11 // pred_fallthru
          _
        // Predicated region
        $region37: #{tpu_custom_call.1} parent=11 // pred_check
          %p252 = pneg %p193
        $region38: #{tpu_custom_call.1} parent=11 // pred_check_branch
          %254 = sbr.rel (%p252) target = $region40
        $region39: #{tpu_custom_call.1} parent=11 // pred_region
          %s256 = ssub.s32 1792, 1792
          %257 = vsyncadd [#allocation4], %s256
          %s258 = sshll.u32 [#allocation3], 4
          %s259 = int_to_ptr.vmem [resolvable:$true] %s258
          %264 = dma.hbm_to_vmem [thread:$0]  %s7, 1792, %s259, [#allocation4], 256, 256, 16
        $region40: #{tpu_custom_call.1} parent=11 // pred_fallthru
          _
      $region12: #{tpu_custom_call.1} parent=5 // pred_fallthru
        _
      %p265 = scmp.lt.s32.totalorder %s20, 2
      // Predicated region
      $region41: #{tpu_custom_call.1} parent=5 // pred_check
        %p266 = pneg %p265
      $region42: #{tpu_custom_call.1} parent=5 // pred_check_branch
        %268 = sbr.rel (%p266) target = $region44
      $region43: #{tpu_custom_call.1} parent=5 // pred_region
        // Predicated region
        $region45: #{tpu_custom_call.1} parent=43 // pred_check
          %p269 = pneg %p40
        $region46: #{tpu_custom_call.1} parent=43 // pred_check_branch
          %271 = sbr.rel (%p269) target = $region48
        $region47: #{tpu_custom_call.1} parent=43 // pred_region
          %p272 = scmp.lt.s32.totalorder %s20, 1
          %s273 = scalar_select %p272, %s20, 1
          %s274 = smul.addr %s273, 8
          %s275 = smul.addr %s274, 8
          %s276 = scalar_lea.vmem %s0, %s275
        $region48: #{tpu_custom_call.1} parent=43 // pred_fallthru
          _
      $region44: #{tpu_custom_call.1} parent=5 // pred_fallthru
        _
      %p277 = scmp.le.s32.totalorder 1, %s20
      %p278 = scmp.lt.s32.totalorder %s20, 3
      %p279 = pnand %p277, %p278
      %p280 = pneg %p279
      // Predicated region
      $region49: #{tpu_custom_call.1} parent=5 // pred_check
        _
      $region50: #{tpu_custom_call.1} parent=5 // pred_check_branch
        %282 = sbr.rel (%p279) target = $region52
      $region51: #{tpu_custom_call.1} parent=5 // pred_region
        %s283 = ssub.s32 %s20, 1
        // Predicated region
        $region53: #{tpu_custom_call.1} parent=51 // pred_check
          %p284 = pneg %p193
        $region54: #{tpu_custom_call.1} parent=51 // pred_check_branch
          %286 = sbr.rel (%p284) target = $region56
        $region55: #{tpu_custom_call.1} parent=51 // pred_region
          %287 = dma.done [#allocation4], 1792
        $region56: #{tpu_custom_call.1} parent=51 // pred_fallthru
          _
        %p288 = scmp.lt.s32.totalorder %s25, 1
        %s289 = scalar_select %p288, %s25, 1
        %s290 = smul.addr %s289, 8
        %s291 = smul.addr %s290, 8
        %s292 = scalar_lea.vmem %s0, %s291
        %p293 = pneg %p46
        %p294 = pneg %p43
        %p295 = pneg %p67
        %p296 = pneg %p64
        %p297 = pneg %p88
        %p298 = pneg %p85
        %p299 = pneg %p109
        %p300 = pneg %p106
        %p301 = pneg %p130
        %p302 = pneg %p127
        %p303 = pneg %p151
        %p304 = pneg %p148
        %p305 = pneg %p172
        %p306 = pneg %p169
        %p307 = pneg %p193
        %p308 = pneg %p190
        %p309 = pneg %p219
        %p310 = pneg %p216
        %s311 = sand.u32 %s206, 1
        %s312 = scalar_lea.sflag [#allocation5], %s311
        %s313 = sand.u32 %s206, 1
        %s314 = smul.addr %s313, 64
        %s315 = scalar_lea.vmem [#allocation6], %s314
        %p316 = scmp.lt.s32.totalorder %s25, 1
        %s317 = scalar_select %p316, %s25, 1
        %s318 = smul.addr %s317, 8
        %s319 = smul.addr %s318, 8
        %s320 = scalar_lea.vmem %s0, %s319
        %v321 = vld [vmem:[%s320] sm:$0xff]
        %v322 = vld [vmem:[%s320 + $0x8] sm:$0xff]
        %v323 = vld [vmem:[%s320 + $0x10] sm:$0xff]
        %v324 = vld [vmem:[%s320 + $0x18] sm:$0xff]
        %v325 = vld [vmem:[%s320 + $0x20] sm:$0xff]
        %v326 = vld [vmem:[%s320 + $0x28] sm:$0xff]
        %v327 = vld [vmem:[%s320 + $0x30] sm:$0xff]
        %v328 = vld [vmem:[%s320 + $0x38] sm:$0xff]
        %v329 = vadd.f32 %v321, %v322
        %330 = vadd.xlane.f32.xlu0 %v329
        %v331 = vpop.xlane.xlu0 %330
        %v332 = vadd.f32 %v323, %v324
        %333 = vadd.xlane.f32.xlu0 %v332
        %v334 = vpop.xlane.xlu0 %333
        %v335 = vadd.f32 %v325, %v326
        %336 = vadd.xlane.f32.xlu0 %v335
        %v337 = vpop.xlane.xlu0 %336
        %v338 = vadd.f32 %v327, %v328
        %339 = vadd.xlane.f32.xlu0 %v338
        %v340 = vpop.xlane.xlu0 %339
        %v341 = vrcp.pop 256.0
        %v342 = vmul.f32 %v331, %v341
        %v343 = vmul.f32 %v334, %v341
        %v344 = vmul.f32 %v337, %v341
        %v345 = vmul.f32 %v340, %v341
        %v346 = vld [vmem:[%s1] sm:$0x3]
        %v347 = vld [vmem:[%s2] sm:$0x3]
        %vm348 = vcmask 261120
        %v350 = vsel %vm348, %v346, 0
        %352 = vmatprep.subr.mxu0 0.0
        %353 = vmatpush1.msra.mxu0 %v342
        %354 = vmatprep.subr.mxu0 0.0
        %355 = vmatpush1.msra.mxu0 %v343
        %356 = vmatprep.subr.mxu0 0.0
        %357 = vmatpush1.msra.mxu0 %v344
        %358 = vmatprep.subr.mxu0 0.0
        %359 = vmatpush1.msra.mxu0 %v345
        %360 = vmatprep.subr.mxu0 0.0
        %361 = vmatpush1.msra.mxu0 0.0
        %362 = vmatprep.subr.mxu0 0.0
        %363 = vmatpush1.msra.mxu0 0.0
        %364 = vmatprep.subr.mxu0 0.0
        %365 = vmatpush1.msra.mxu0 0.0
        %366 = vmatprep.subr.mxu0 0.0
        %367 = vmatpush1.msra.mxu0 0.0
        %368 = vmatprep.subr.mxu0 0.0
        %369 = vmatpush1.msra.mxu0 0.0
        %370 = vmatprep.subr.mxu0 0.0
        %371 = vmatpush1.msra.mxu0 0.0
        %372 = vmatprep.subr.mxu0 0.0
        %373 = vmatpush1.msra.mxu0 0.0
        %374 = vmatprep.subr.mxu0 0.0
        %375 = vmatpush1.msra.mxu0 0.0
        %376 = vmatprep.subr.mxu0 0.0
        %377 = vmatpush1.msra.mxu0 0.0
        %378 = vmatprep.subr.mxu0 0.0
        %379 = vmatpush1.msra.mxu0 0.0
        %380 = vmatprep.subr.mxu0 0.0
        %381 = vmatpush1.msra.mxu0 0.0
        %382 = vmatprep.subr.mxu0 0.0
        %383 = vmatpush1.msra.mxu0 0.0
        %384 = vmatprep.subr.mxu0 0.0
        %385 = vmatpush1.msra.mxu0 0.0
        %386 = vmatprep.subr.mxu0 0.0
        %387 = vmatpush1.msra.mxu0 0.0
        %388 = vmatprep.subr.mxu0 0.0
        %389 = vmatpush1.msra.mxu0 0.0
        %390 = vmatprep.subr.mxu0 0.0
        %391 = vmatpush1.msra.mxu0 0.0
        %392 = vmatprep.subr.mxu0 0.0
        %393 = vmatpush1.msra.mxu0 0.0
        %394 = vmatprep.subr.mxu0 0.0
        %395 = vmatpush1.msra.mxu0 0.0
        %396 = vmatprep.subr.mxu0 0.0
        %397 = vmatpush1.msra.mxu0 0.0
        %398 = vmatprep.subr.mxu0 0.0
        %399 = vmatpush1.msra.mxu0 0.0
        %400 = vmatprep.subr.mxu0 0.0
        %401 = vmatpush1.msra.mxu0 0.0
        %402 = vmatprep.subr.mxu0 0.0
        %403 = vmatpush1.msra.mxu0 0.0
        %404 = vmatprep.subr.mxu0 0.0
        %405 = vmatpush1.msra.mxu0 0.0
        %406 = vmatprep.subr.mxu0 0.0
        %407 = vmatpush1.msra.mxu0 0.0
        %408 = vmatprep.subr.mxu0 0.0
        %409 = vmatpush1.msra.mxu0 0.0
        %410 = vmatprep.subr.mxu0 0.0
        %411 = vmatpush1.msra.mxu0 0.0
        %412 = vmatprep.subr.mxu0 0.0
        %413 = vmatpush1.msra.mxu0 0.0
        %414 = vmatprep.subr.mxu0 0.0
        %415 = vmatpush1.msra.mxu0 0.0
        %416 = vmatprep.mubr.f32.mxu0 0.0
        %417 = vmatmul.mubr.f32.gmra.mrb[0].mxu0 %v350
        %v418 = vpop.f32.mrb[0].mxu0
        %v419 = vadd.f32 %v347, %v418
        %v420 = vpop.f32.mrb[0].mxu0
        %421 = vdwg.mxu0
        %v422 = vmax.f32 %v419, 0.0
        %v423 = vld [vmem:[%s3] sm:$0xff]
        %v424 = vld [vmem:[%s3 + $0x8] sm:$0xff]
        %v425 = vld [vmem:[%s3 + $0x10] sm:$0xff]
        %v426 = vld [vmem:[%s3 + $0x18] sm:$0xff]
        %v427 = vld [vmem:[%s4] sm:$0xff]
        %v428 = vld [vmem:[%s4 + $0x8] sm:$0xff]
        %v429 = vld [vmem:[%s4 + $0x10] sm:$0xff]
        %v430 = vld [vmem:[%s4 + $0x18] sm:$0xff]
        %vm431 = vcmask 15360
        %v433 = vsel %vm431, %v423, 0
        %v436 = vsel %vm431, %v424, 0
        %v439 = vsel %vm431, %v425, 0
        %v442 = vsel %vm431, %v426, 0
        %vm444 = vcmask 1041408
        %v446 = vsel %vm444, %v422, 0
        %448 = vmatprep.subr.mxu0 0.0
        %449 = vmatpush1.msra.mxu0 %v446
        %450 = vmatprep.subr.mxu0 0.0
        %451 = vmatpush1.msra.mxu0 0.0
        %452 = vmatprep.subr.mxu0 0.0
        %453 = vmatpush1.msra.mxu0 0.0
        %454 = vmatprep.subr.mxu0 0.0
        %455 = vmatpush1.msra.mxu0 0.0
        %456 = vmatprep.subr.mxu0 0.0
        %457 = vmatpush1.msra.mxu0 0.0
        %458 = vmatprep.subr.mxu0 0.0
        %459 = vmatpush1.msra.mxu0 0.0
        %460 = vmatprep.subr.mxu0 0.0
        %461 = vmatpush1.msra.mxu0 0.0
        %462 = vmatprep.subr.mxu0 0.0
        %463 = vmatpush1.msra.mxu0 0.0
        %464 = vmatprep.subr.mxu0 0.0
        %465 = vmatpush1.msra.mxu0 0.0
        %466 = vmatprep.subr.mxu0 0.0
        %467 = vmatpush1.msra.mxu0 0.0
        %468 = vmatprep.subr.mxu0 0.0
        %469 = vmatpush1.msra.mxu0 0.0
        %470 = vmatprep.subr.mxu0 0.0
        %471 = vmatpush1.msra.mxu0 0.0
        %472 = vmatprep.subr.mxu0 0.0
        %473 = vmatpush1.msra.mxu0 0.0
        %474 = vmatprep.subr.mxu0 0.0
        %475 = vmatpush1.msra.mxu0 0.0
        %476 = vmatprep.subr.mxu0 0.0
        %477 = vmatpush1.msra.mxu0 0.0
        %478 = vmatprep.subr.mxu0 0.0
        %479 = vmatpush1.msra.mxu0 0.0
        %480 = vmatprep.subr.mxu0 0.0
        %481 = vmatpush1.msra.mxu0 0.0
        %482 = vmatprep.subr.mxu0 0.0
        %483 = vmatpush1.msra.mxu0 0.0
        %484 = vmatprep.subr.mxu0 0.0
        %485 = vmatpush1.msra.mxu0 0.0
        %486 = vmatprep.subr.mxu0 0.0
        %487 = vmatpush1.msra.mxu0 0.0
        %488 = vmatprep.subr.mxu0 0.0
        %489 = vmatpush1.msra.mxu0 0.0
        %490 = vmatprep.subr.mxu0 0.0
        %491 = vmatpush1.msra.mxu0 0.0
        %492 = vmatprep.subr.mxu0 0.0
        %493 = vmatpush1.msra.mxu0 0.0
        %494 = vmatprep.subr.mxu0 0.0
        %495 = vmatpush1.msra.mxu0 0.0
        %496 = vmatprep.subr.mxu0 0.0
        %497 = vmatpush1.msra.mxu0 0.0
        %498 = vmatprep.subr.mxu0 0.0
        %499 = vmatpush1.msra.mxu0 0.0
        %500 = vmatprep.subr.mxu0 0.0
        %501 = vmatpush1.msra.mxu0 0.0
        %502 = vmatprep.subr.mxu0 0.0
        %503 = vmatpush1.msra.mxu0 0.0
        %504 = vmatprep.subr.mxu0 0.0
        %505 = vmatpush1.msra.mxu0 0.0
        %506 = vmatprep.subr.mxu0 0.0
        %507 = vmatpush1.msra.mxu0 0.0
        %508 = vmatprep.subr.mxu0 0.0
        %509 = vmatpush1.msra.mxu0 0.0
        %510 = vmatprep.subr.mxu0 0.0
        %511 = vmatpush1.msra.mxu0 0.0
        %512 = vmatprep.mubr.f32.mxu0 0.0
        %513 = vmatmul.mubr.f32.gmra.mrb[0].mxu0 %v433
        %v514 = vpop.f32.mrb[0].mxu0
        %v515 = vadd.f32 %v427, %v514
        %v516 = vpop.f32.mrb[0].mxu0
        %517 = vmatprep.mubr.f32.mxu0 0.0
        %518 = vmatmul.mubr.f32.gmra.mrb[0].mxu0 %v436
        %v519 = vpop.f32.mrb[0].mxu0
        %v520 = vadd.f32 %v428, %v519
        %v521 = vpop.f32.mrb[0].mxu0
        %522 = vmatprep.mubr.f32.mxu0 0.0
        %523 = vmatmul.mubr.f32.gmra.mrb[0].mxu0 %v439
        %v524 = vpop.f32.mrb[0].mxu0
        %v525 = vadd.f32 %v429, %v524
        %v526 = vpop.f32.mrb[0].mxu0
        %527 = vmatprep.mubr.f32.mxu0 0.0
        %528 = vmatmul.mubr.f32.gmra.mrb[0].mxu0 %v442
        %v529 = vpop.f32.mrb[0].mxu0
        %v530 = vadd.f32 %v430, %v529
        %v531 = vpop.f32.mrb[0].mxu0
        %532 = vdwg.mxu0
        %v533 = vxor.u32 %v515, 2147483648
        %v534 = vxor.u32 %v520, 2147483648
        %v535 = vxor.u32 %v525, 2147483648
        %v536 = vxor.u32 %v530, 2147483648
        %v537 = vmul.f32 %v533, 1.442695
        %v538 = vpow.pop %v537
        %v539 = vmul.f32 %v534, 1.442695
        %v540 = vpow.pop %v539
        %v541 = vmul.f32 %v535, 1.442695
        %v542 = vpow.pop %v541
        %v543 = vmul.f32 %v536, 1.442695
        %v544 = vpow.pop %v543
        %v545 = vadd.f32 %v538, 1.0
        %v546 = vadd.f32 %v540, 1.0
        %v547 = vadd.f32 %v542, 1.0
        %v548 = vadd.f32 %v544, 1.0
        %v549 = vrcp.pop %v545
        %v550 = vmul.f32 1.0, %v549
        %v551 = vrcp.pop %v546
        %v552 = vmul.f32 1.0, %v551
        %v553 = vrcp.pop %v547
        %v554 = vmul.f32 1.0, %v553
        %v555 = vrcp.pop %v548
        %v556 = vmul.f32 1.0, %v555
        %v557 = vld [vmem:[%s5] sm:$0xff]
        %v558 = vld [vmem:[%s5 + $0x8] sm:$0xff]
        %v559 = vld [vmem:[%s5 + $0x10] sm:$0xff]
        %v560 = vld [vmem:[%s5 + $0x18] sm:$0xff]
        %v561 = vld [vmem:[%s5 + $0x20] sm:$0xff]
        %v562 = vld [vmem:[%s5 + $0x28] sm:$0xff]
        %v563 = vld [vmem:[%s5 + $0x30] sm:$0xff]
        %v565 = vsel %vm348, %v557, 0
        %v568 = vsel %vm348, %v558, 0
        %v571 = vsel %vm348, %v559, 0
        %v574 = vsel %vm348, %v560, 0
        %v577 = vsel %vm348, %v561, 0
        %v580 = vsel %vm348, %v562, 0
        %v583 = vsel %vm348, %v563, 0
        %585 = vmatprep.subr.mxu0 %v322
        %586 = vmatpush1.msra.mxu0 %v321
        %587 = vmatprep.subr.mxu0 %v324
        %588 = vmatpush1.msra.mxu0 %v323
        %589 = vmatprep.subr.mxu0 %v326
        %590 = vmatpush1.msra.mxu0 %v325
        %591 = vmatprep.subr.mxu0 %v328
        %592 = vmatpush1.msra.mxu0 %v327
        %593 = vmatprep.subr.mxu0 0.0
        %594 = vmatpush1.msra.mxu0 0.0
        %595 = vmatprep.subr.mxu0 0.0
        %596 = vmatpush1.msra.mxu0 0.0
        %597 = vmatprep.subr.mxu0 0.0
        %598 = vmatpush1.msra.mxu0 0.0
        %599 = vmatprep.subr.mxu0 0.0
        %600 = vmatpush1.msra.mxu0 0.0
        %601 = vmatprep.subr.mxu0 0.0
        %602 = vmatpush1.msra.mxu0 0.0
        %603 = vmatprep.subr.mxu0 0.0
        %604 = vmatpush1.msra.mxu0 0.0
        %605 = vmatprep.subr.mxu0 0.0
        %606 = vmatpush1.msra.mxu0 0.0
        %607 = vmatprep.subr.mxu0 0.0
        %608 = vmatpush1.msra.mxu0 0.0
        %609 = vmatprep.subr.mxu0 0.0
        %610 = vmatpush1.msra.mxu0 0.0
        %611 = vmatprep.subr.mxu0 0.0
        %612 = vmatpush1.msra.mxu0 0.0
        %613 = vmatprep.subr.mxu0 0.0
        %614 = vmatpush1.msra.mxu0 0.0
        %615 = vmatprep.subr.mxu0 0.0
        %616 = vmatpush1.msra.mxu0 0.0
        %617 = vmatprep.subr.mxu0 0.0
        %618 = vmatpush1.msra.mxu0 0.0
        %619 = vmatprep.subr.mxu0 0.0
        %620 = vmatpush1.msra.mxu0 0.0
        %621 = vmatprep.subr.mxu0 0.0
        %622 = vmatpush1.msra.mxu0 0.0
        %623 = vmatprep.subr.mxu0 0.0
        %624 = vmatpush1.msra.mxu0 0.0
        %625 = vmatprep.subr.mxu0 0.0
        %626 = vmatpush1.msra.mxu0 0.0
        %627 = vmatprep.subr.mxu0 0.0
        %628 = vmatpush1.msra.mxu0 0.0
        %629 = vmatprep.subr.mxu0 0.0
        %630 = vmatpush1.msra.mxu0 0.0
        %631 = vmatprep.subr.mxu0 0.0
        %632 = vmatpush1.msra.mxu0 0.0
        %633 = vmatprep.subr.mxu0 0.0
        %634 = vmatpush1.msra.mxu0 0.0
        %635 = vmatprep.subr.mxu0 0.0
        %636 = vmatpush1.msra.mxu0 0.0
        %637 = vmatprep.subr.mxu0 0.0
        %638 = vmatpush1.msra.mxu0 0.0
        %639 = vmatprep.subr.mxu0 0.0
        %640 = vmatpush1.msra.mxu0 0.0
        %641 = vmatprep.subr.mxu0 0.0
        %642 = vmatpush1.msra.mxu0 0.0
        %643 = vmatprep.subr.mxu0 0.0
        %644 = vmatpush1.msra.mxu0 0.0
        %645 = vmatprep.subr.mxu0 0.0
        %646 = vmatpush1.msra.mxu0 0.0
        %647 = vmatprep.subr.mxu0 0.0
        %648 = vmatpush1.msra.mxu0 0.0
        %649 = vmatprep.mubr.f32.mxu0 0.0
        %650 = vmatmul.mubr.f32.gmra.mrb[0].mxu0 %v565
        %v651 = vpop.f32.mrb[0].mxu0
        %v652 = vadd.f32 0.0, %v651
        %v653 = vpop.f32.mrb[0].mxu0
        %v654 = vadd.f32 0.0, %v653
        %655 = vmatprep.mubr.f32.mxu0 0.0
        %656 = vmatmul.mubr.f32.gmra.mrb[0].mxu0 %v568
        %v657 = vpop.f32.mrb[0].mxu0
        %v658 = vadd.f32 0.0, %v657
        %v659 = vpop.f32.mrb[0].mxu0
        %v660 = vadd.f32 0.0, %v659
        %661 = vmatprep.mubr.f32.mxu0 0.0
        %662 = vmatmul.mubr.f32.gmra.mrb[0].mxu0 %v571
        %v663 = vpop.f32.mrb[0].mxu0
        %v664 = vadd.f32 0.0, %v663
        %v665 = vpop.f32.mrb[0].mxu0
        %v666 = vadd.f32 0.0, %v665
        %667 = vmatprep.mubr.f32.mxu0 0.0
        %668 = vmatmul.mubr.f32.gmra.mrb[0].mxu0 %v574
        %v669 = vpop.f32.mrb[0].mxu0
        %v670 = vadd.f32 0.0, %v669
        %v671 = vpop.f32.mrb[0].mxu0
        %v672 = vadd.f32 0.0, %v671
        %673 = vmatprep.mubr.f32.mxu0 0.0
        %674 = vmatmul.mubr.f32.gmra.mrb[0].mxu0 %v577
        %v675 = vpop.f32.mrb[0].mxu0
        %v676 = vadd.f32 0.0, %v675
        %v677 = vpop.f32.mrb[0].mxu0
        %v678 = vadd.f32 0.0, %v677
        %679 = vmatprep.mubr.f32.mxu0 0.0
        %680 = vmatmul.mubr.f32.gmra.mrb[0].mxu0 %v580
        %v681 = vpop.f32.mrb[0].mxu0
        %v682 = vadd.f32 0.0, %v681
        %v683 = vpop.f32.mrb[0].mxu0
        %v684 = vadd.f32 0.0, %v683
        %685 = vmatprep.mubr.f32.mxu0 0.0
        %686 = vmatmul.mubr.f32.gmra.mrb[0].mxu0 %v583
        %v687 = vpop.f32.mrb[0].mxu0
        %v688 = vadd.f32 0.0, %v687
        %v689 = vpop.f32.mrb[0].mxu0
        %v690 = vadd.f32 0.0, %v689
        %691 = vdwg.mxu0
        %v692 = vld [vmem:[#allocation3] sm:$0xff]
        %v693 = vld [vmem:[#allocation3 + $0x8] sm:$0xff]
        %v694 = vld [vmem:[#allocation3 + $0x10] sm:$0xff]
        %v695 = vld [vmem:[#allocation3 + $0x18] sm:$0xff]
        %v696 = vld [vmem:[#allocation3 + $0x20] sm:$0xff]
        %v697 = vld [vmem:[#allocation3 + $0x28] sm:$0xff]
        %v698 = vld [vmem:[#allocation3 + $0x30] sm:$0xff]
        %v699 = vld [vmem:[#allocation3 + $0x38] sm:$0xff]
        %v700 = vld [vmem:[#allocation3 + $0x40] sm:$0xff]
        %v701 = vld [vmem:[#allocation3 + $0x48] sm:$0xff]
        %v702 = vld [vmem:[#allocation3 + $0x50] sm:$0xff]
        %v703 = vld [vmem:[#allocation3 + $0x58] sm:$0xff]
        %v704 = vld [vmem:[#allocation3 + $0x60] sm:$0xff]
        %v705 = vld [vmem:[#allocation3 + $0x68] sm:$0xff]
        %v706 = vmul.f32 %v652, %v692
        %v707 = vmul.f32 %v654, %v693
        %v708 = vmul.f32 %v658, %v694
        %v709 = vmul.f32 %v660, %v695
        %v710 = vmul.f32 %v664, %v696
        %v711 = vmul.f32 %v666, %v697
        %v712 = vmul.f32 %v670, %v698
        %v713 = vmul.f32 %v672, %v699
        %v714 = vmul.f32 %v676, %v700
        %v715 = vmul.f32 %v678, %v701
        %v716 = vmul.f32 %v682, %v702
        %v717 = vmul.f32 %v684, %v703
        %v718 = vmul.f32 %v688, %v704
        %v719 = vmul.f32 %v690, %v705
        %721 = vrot.lane.b32.xlu0 %v707, 3
        %v722 = vpop.permute.xlu0 %721
        %725 = vrot.lane.b32.xlu0 %v706, 3
        %v726 = vpop.permute.xlu0 %725
        %vm727 = vcmask 23552
        %v728 = vsel %vm727, %v726, %v722
        %v731 = vsel %vm727, %v722, %v726
        %733 = vrot.lane.b32.xlu0 %v709, 2
        %v734 = vpop.permute.xlu0 %733
        %737 = vrot.lane.b32.xlu0 %v708, 2
        %v738 = vpop.permute.xlu0 %737
        %v739 = vsel %vm431, %v738, %v734
        %v742 = vsel %vm431, %v734, %v738
        %v743 = vadd.f32 %v731, %v742
        %v744 = vadd.f32 %v728, %v739
        %746 = vrot.lane.b32.xlu0 %v711, 1
        %v747 = vpop.permute.xlu0 %746
        %750 = vrot.lane.b32.xlu0 %v710, 1
        %v751 = vpop.permute.xlu0 %750
        %vm752 = vcmask 7168
        %v753 = vsel %vm752, %v751, %v747
        %v756 = vsel %vm752, %v747, %v751
        %v757 = vadd.f32 %v743, %v756
        %v758 = vadd.f32 %v744, %v753
        %v759 = vadd.f32 %v757, %v712
        %v760 = vadd.f32 %v758, %v713
        %763 = vrot.lane.b32.xlu0 %v714, 127
        %v764 = vpop.permute.xlu0 %763
        %765 = vrot.lane.b32.xlu0 %v715, 127
        %v766 = vpop.permute.xlu0 %765
        %vm767 = vcmask 1039360
        %v768 = vsel %vm767, %v764, %v766
        %v772 = vsel %vm767, %v766, %v764
        %v773 = vadd.f32 %v759, %v768
        %v774 = vadd.f32 %v760, %v772
        %777 = vrot.lane.b32.xlu0 %v716, 126
        %v778 = vpop.permute.xlu0 %777
        %779 = vrot.lane.b32.xlu0 %v717, 126
        %v780 = vpop.permute.xlu0 %779
        %vm781 = vcmask 1031168
        %v782 = vsel %vm781, %v778, %v780
        %v786 = vsel %vm781, %v780, %v778
        %v787 = vadd.f32 %v773, %v782
        %v788 = vadd.f32 %v774, %v786
        %791 = vrot.lane.b32.xlu0 %v718, 125
        %v792 = vpop.permute.xlu0 %791
        %793 = vrot.lane.b32.xlu0 %v719, 125
        %v794 = vpop.permute.xlu0 %793
        %vm795 = vcmask 1022976
        %v796 = vsel %vm795, %v792, %v794
        %v800 = vsel %vm795, %v794, %v792
        %v801 = vadd.f32 %v787, %v796
        %v802 = vadd.f32 %v788, %v800
        %804 = vrot.lane.b32.xlu0 %v802, 48
        %v805 = vpop.permute.xlu0 %804
        %808 = vrot.lane.b32.xlu0 %v801, 48
        %v809 = vpop.permute.xlu0 %808
        %vm810 = vcmask 392192
        %v811 = vsel %vm810, %v809, %v805
        %v814 = vsel %vm810, %v805, %v809
        %815 = vrot.lane.b32.xlu0 %v802, 32
        %v816 = vpop.permute.xlu0 %815
        %818 = vrot.lane.b32.xlu0 %v801, 32
        %v819 = vpop.permute.xlu0 %818
        %v820 = vsel %vm348, %v819, %v816
        %v822 = vsel %vm348, %v816, %v819
        %v824 = vrot.slane %v822, 1
        %v825 = vrot.slane %v820, 1
        %v828 = vadd.f32 %v814, %v824
        %v829 = vadd.f32 %v811, %v825
        %830 = vrot.lane.b32.xlu0 %v802, 16
        %v831 = vpop.permute.xlu0 %830
        %833 = vrot.lane.b32.xlu0 %v801, 16
        %v834 = vpop.permute.xlu0 %833
        %vm835 = vcmask 130048
        %v836 = vsel %vm835, %v834, %v831
        %v838 = vsel %vm835, %v831, %v834
        %v840 = vrot.slane %v838, 2
        %v841 = vrot.slane %v836, 2
        %v844 = vadd.f32 %v828, %v840
        %v845 = vadd.f32 %v829, %v841
        %v846 = vrot.slane %v801, 3
        %v847 = vrot.slane %v802, 3
        %v850 = vadd.f32 %v844, %v846
        %v851 = vadd.f32 %v845, %v847
        %852 = vrot.lane.b32.xlu0 %v801, 112
        %v853 = vpop.permute.xlu0 %852
        %854 = vrot.lane.b32.xlu0 %v802, 112
        %v855 = vpop.permute.xlu0 %854
        %vm856 = vcmask 916480
        %v857 = vsel %vm856, %v853, %v855
        %v860 = vsel %vm856, %v855, %v853
        %v862 = vrot.slane %v857, 4
        %v863 = vrot.slane %v860, 4
        %v866 = vadd.f32 %v850, %v862
        %v867 = vadd.f32 %v851, %v863
        %868 = vrot.lane.b32.xlu0 %v801, 96
        %v869 = vpop.permute.xlu0 %868
        %870 = vrot.lane.b32.xlu0 %v802, 96
        %v871 = vpop.permute.xlu0 %870
        %vm872 = vcmask 785408
        %v873 = vsel %vm872, %v869, %v871
        %v876 = vsel %vm872, %v871, %v869
        %v878 = vrot.slane %v873, 5
        %v879 = vrot.slane %v876, 5
        %v882 = vadd.f32 %v866, %v878
        %v883 = vadd.f32 %v867, %v879
        %884 = vrot.lane.b32.xlu0 %v801, 80
        %v885 = vpop.permute.xlu0 %884
        %886 = vrot.lane.b32.xlu0 %v802, 80
        %v887 = vpop.permute.xlu0 %886
        %vm888 = vcmask 654336
        %v889 = vsel %vm888, %v885, %v887
        %v892 = vsel %vm888, %v887, %v885
        %v894 = vrot.slane %v889, 6
        %v895 = vrot.slane %v892, 6
        %v898 = vadd.f32 %v882, %v894
        %v899 = vadd.f32 %v883, %v895
        %v900 = vld [vmem:[#allocation2] sm:$0x1]
        %s901 = vtos %v900
        %v902 = vstv %s901
        %v903 = vadd.f32 %v898, %v902
        %v904 = vadd.f32 %v899, %v902
        %v905 = vxor.u32 %v903, 2147483648
        %v906 = vxor.u32 %v904, 2147483648
        %v907 = vmul.f32 %v905, 1.442695
        %v908 = vpow.pop %v907
        %v909 = vmul.f32 %v906, 1.442695
        %v910 = vpow.pop %v909
        %v911 = vadd.f32 %v908, 1.0
        %v912 = vadd.f32 %v910, 1.0
        %v913 = vrcp.pop %v911
        %v914 = vmul.f32 1.0, %v913
        %v915 = vrcp.pop %v912
        %v916 = vmul.f32 1.0, %v915
        %918 = vset.pattern.permute.xlu0 0
        %919 = vperm.xlu0 %918, %v550
        %v920 = vpop.permute.xlu0 %919
        %923 = vset.pattern.permute.xlu0 0
        %924 = vperm.xlu0 %923, %v552
        %v925 = vpop.permute.xlu0 %924
        %928 = vset.pattern.permute.xlu0 0
        %929 = vperm.xlu0 %928, %v554
        %v930 = vpop.permute.xlu0 %929
        %933 = vset.pattern.permute.xlu0 0
        %934 = vperm.xlu0 %933, %v556
        %v935 = vpop.permute.xlu0 %934
        %v937 = vlaneseq
        %v938 = vshrl.u32 %v937, 7
        %v939 = vsub.s32 0, %v938
        %v940 = vrot.slane %v914, %v939
        %v941 = vlaneseq
        %v942 = vshrl.u32 %v941, 7
        %v943 = vsub.s32 0, %v942
        %v944 = vrot.slane %v916, %v943
        %v945 = vadd.f32 %v920, %v940
        %v946 = vadd.f32 %v920, %v944
        %v947 = vadd.f32 %v925, %v940
        %v948 = vadd.f32 %v925, %v944
        %v949 = vadd.f32 %v930, %v940
        %v950 = vadd.f32 %v930, %v944
        %v951 = vadd.f32 %v935, %v940
        %v952 = vadd.f32 %v935, %v944
        %v953 = vmul.f32 %v321, %v945
        %v954 = vmul.f32 %v322, %v946
        %v955 = vmul.f32 %v323, %v947
        %v956 = vmul.f32 %v324, %v948
        %v957 = vmul.f32 %v325, %v949
        %v958 = vmul.f32 %v326, %v950
        %v959 = vmul.f32 %v327, %v951
        %v960 = vmul.f32 %v328, %v952
        %961 = vst [vmem:[%s315] sm:$0xff] %v953
        %962 = vst [vmem:[%s315 + $0x8] sm:$0xff] %v954
        %963 = vst [vmem:[%s315 + $0x10] sm:$0xff] %v955
        %964 = vst [vmem:[%s315 + $0x18] sm:$0xff] %v956
        %965 = vst [vmem:[%s315 + $0x20] sm:$0xff] %v957
        %966 = vst [vmem:[%s315 + $0x28] sm:$0xff] %v958
        %967 = vst [vmem:[%s315 + $0x30] sm:$0xff] %v959
        %968 = vst [vmem:[%s315 + $0x38] sm:$0xff] %v960
        %s969 = sand.u32 %s206, 1
        %s970 = scalar_lea.sflag [#allocation5], %s969
        %s971 = sand.u32 %s206, 1
        %s972 = smul.addr %s971, 64
        %s973 = scalar_lea.vmem [#allocation6], %s972
        // Predicated region
        $region57: #{tpu_custom_call.1} parent=51 // pred_check
          %p974 = pneg %p216
        $region58: #{tpu_custom_call.1} parent=51 // pred_check_branch
          %976 = sbr.rel (%p974) target = $region60
        $region59: #{tpu_custom_call.1} parent=51 // pred_region
          %s978 = ssub.s32 1024, 1024
          %979 = vsyncadd %s970, %s978
          %s980 = smul.addr %s25, 8
          %s981 = smul.addr %s980, 128
          %s982 = scalar_lea.hbm %s8, %s981
          %s983 = sshll.u32 %s973, 4
          %s984 = int_to_ptr.vmem [resolvable:$true] %s983
          %989 = dma.vmem_to_hbm [thread:$0]  %s984, 1024, %s982, %s970, 256, 256, 16
        $region60: #{tpu_custom_call.1} parent=51 // pred_fallthru
          _
      $region52: #{tpu_custom_call.1} parent=5 // pred_fallthru
        _
      %p990 = scmp.le.s32.totalorder 2, %s20
      // Predicated region
      $region61: #{tpu_custom_call.1} parent=5 // pred_check
        %p991 = pneg %p990
      $region62: #{tpu_custom_call.1} parent=5 // pred_check_branch
        %993 = sbr.rel (%p991) target = $region64
      $region63: #{tpu_custom_call.1} parent=5 // pred_region
        %s994 = ssub.s32 %s20, 2
        // Predicated region
        $region65: #{tpu_custom_call.1} parent=63 // pred_check
          %p995 = pneg %p222
        $region66: #{tpu_custom_call.1} parent=63 // pred_check_branch
          %997 = sbr.rel (%p995) target = $region68
        $region67: #{tpu_custom_call.1} parent=63 // pred_region
          %s998 = sand.u32 %s207, 1
          %s999 = scalar_lea.sflag [#allocation5], %s998
          %s1000 = sand.u32 %s207, 1
          %s1001 = smul.addr %s1000, 64
          %s1002 = scalar_lea.vmem [#allocation6], %s1001
          %1003 = dma.done %s999, 1024
        $region68: #{tpu_custom_call.1} parent=63 // pred_fallthru
          _
      $region64: #{tpu_custom_call.1} parent=5 // pred_fallthru
        _
    $region6: #{tpu_custom_call.1} parent=1 // loop_footer
      %s24 = sadd.s32 1, %s20
    $region7: #{tpu_custom_call.1} parent=1 // loop_footer_branch
      %19 = sbr.rel target = $region3
    $region8: #{tpu_custom_call.1} parent=1 // loop_exit
      _
    %1004 = vsyncpa [#allocation4], 1
    %s1005 = scalar_lea.sflag [#allocation4], 1
    %1006 = vsyncpa %s1005, 1
    %1007 = vsyncpa [#allocation5], 1
    %s1008 = scalar_lea.sflag [#allocation5], 1
    %1009 = vsyncpa %s1008, 1

</llo_original>
